<compile_context>
chip_gen: v7x
topology: tpu7x:2x2x1
jax: 0.10.0
libtpu: 0.0.40
codegen_flags: <defaults>
</compile_context>

<pallas_src>
import functools

import jax
import jax.numpy as jnp
from jax import lax
from jax.experimental import pallas as pl
from jax.experimental.pallas import tpu as pltpu

EPS = 1e-5  # PyTorch GroupNorm default eps


def _gn_relu_fused(h, gamma, beta, bb, n_pts):
    """GroupNorm(num_groups=1) + ReLU over a row-packed (bb*n_pts, C) f32 slab.

    Statistics are per sample (rows [s*n_pts, (s+1)*n_pts)). Point-axis (VPU)
    reduction happens first; only the tiny (bb,1,C) result goes through the
    lane (XLU) reduce. Normalize + affine + ReLU is one scale/shift/max pass.
    Emits bf16 (the value the next matmul consumes anyway).
    """
    c = h.shape[-1]
    h3 = h.reshape(bb, n_pts, c)                       # layout no-op (n_pts % 8 == 0)
    # Point axis first: vreg-vs-vreg VPU adds, no cross-lane traffic on the slab.
    s1c = jnp.sum(h3, axis=1, keepdims=True)           # (bb, 1, C)
    s2c = jnp.sum(h3 * h3, axis=1, keepdims=True)      # (bb, 1, C)
    # Tiny lane reduce on the per-channel partials only.
    s1 = jnp.sum(s1c, axis=2, keepdims=True)           # (bb, 1, 1)
    s2 = jnp.sum(s2c, axis=2, keepdims=True)           # (bb, 1, 1)
    inv_cnt = 1.0 / float(n_pts * c)
    mu = s1 * inv_cnt
    var = s2 * inv_cnt - mu * mu                        # biased variance (PyTorch)
    scale = lax.rsqrt(var + EPS) * gamma                # (bb, 1, C)  rsqrt -> EUP slot
    shift = beta - mu * scale                           # (bb, 1, C)
    y = jnp.maximum(h3 * scale + shift, 0.0).astype(jnp.bfloat16)
    return y.reshape(bb * n_pts, c)


def pointnet_kernel(x_ref,
                    w1_ref, b1_ref, g1_ref, be1_ref,
                    w2_ref, b2_ref, g2_ref, be2_ref,
                    w3_ref, b3_ref,
                    out_ref, *, bb, n_pts):
    x = x_ref[...]                                                    # (bb*N, Cin) bf16

    # Conv1d(Cin -> 64, k=1): one row-packed bf16 matmul, f32 accumulation.
    h = jnp.dot(x, w1_ref[...], preferred_element_type=jnp.float32) + b1_ref[...]
    h = _gn_relu_fused(h, g1_ref[...], be1_ref[...], bb, n_pts)       # bf16 out

    # Conv1d(64 -> 128, k=1)
    h = jnp.dot(h, w2_ref[...], preferred_element_type=jnp.float32) + b2_ref[...]
    h = _gn_relu_fused(h, g2_ref[...], be2_ref[...], bb, n_pts)       # bf16 out

    # Conv1d(128 -> Cout, k=1); bias deferred past the max (translation-equivariant).
    h = jnp.dot(h, w3_ref[...], preferred_element_type=jnp.float32)

    # torch.max(x, 2)[0]: per-sample max over the point axis, then add bias.
    h3 = h.reshape(bb, n_pts, h.shape[-1])
    out_ref[...] = jnp.max(h3, axis=1, keepdims=True) + b3_ref[...]   # (bb, 1, Cout)


def _vmem_budget_bytes():
    """~75% of the chip's VMEM (v5e/v6e: 96 MiB, v7x: 48 MiB); safe fallback 48 MiB."""
    default_cap = 64 << 20
    try:
        info = pltpu.get_tpu_info()
        cap = int(getattr(info, "vmem_capacity_bytes", default_cap))
    except Exception:
        cap = default_cap
    return max(32 << 20, (cap * 3) // 4)


def _pick_block_batch(batch, n_pts, row_cap):
    """Largest divisor of `batch` whose packed row count fits `row_cap`, capped at
    batch//2 so the grid has >= 2 steps (both v7x TensorCores get work), preferring
    divisors that keep the bf16 row count (Bb*N) a multiple of 16."""
    max_bb = max(1, batch // 2) if batch >= 2 else 1
    divisors = [d for d in range(1, max_bb + 1) if batch % d == 0]
    fitting = [d for d in divisors if d * n_pts <= row_cap]
    if not fitting:
        # TODO(synk): N alone exceeds the row cap -> needs the point-axis-tiled GN path.
        fitting = [1]
    aligned = [d for d in fitting if (d * n_pts) % 16 == 0]
    pool = aligned or fitting
    return max(pool)


def pointnet_forward(x_ncw, params):
    """x_ncw: (B, C_in, N) float32, PyTorch NCW layout. Returns (B, C_out) f32."""
    (w1t, b1, g1, be1, w2t, b2, g2, be2, w3t, b3) = params
    B, Cin, N = x_ncw.shape
    Cout = w3t.shape[1]
    assert N % 8 == 0, "point count must be a multiple of 8 (sublane tile)"

    vmem_budget = _vmem_budget_bytes()
    # ~3 KiB live VMEM per packed row (lane-padded bf16 x, double-buffered, plus
    # f32/bf16 intermediate slabs); cap rows so step overhead is amortized but we fit.
    row_cap = max(1024, min(16384, vmem_budget // (3 * 1024)))
    Bb = _pick_block_batch(B, N, row_cap)
    grid = (B // Bb,)

    # Row-packed layout: (B*N, Cin), channels on lanes -> lane-dense intermediates
    # and output. Cast to bf16 here so transpose+cast is one small fused XLA pass
    # and the x DMA bytes are halved.
    x_rows = jnp.transpose(x_ncw, (0, 2, 1)).reshape(B * N, Cin).astype(jnp.bfloat16)
    w1b, w2b, w3b = (w.astype(jnp.bfloat16) for w in (w1t, w2t, w3t))

    def full(a):   # whole-array block, constant index map -> stays VMEM-resident
        return pl.BlockSpec(a.shape, lambda g, n=len(a.shape): (0,) * n)

    kernel = functools.partial(pointnet_kernel, bb=Bb, n_pts=N)

    out = pl.pallas_call(
        kernel,
        out_shape=jax.ShapeDtypeStruct((B, 1, Cout), jnp.float32),
        grid_spec=pltpu.PrefetchScalarGridSpec(
            num_scalar_prefetch=0,
            grid=grid,
            in_specs=[
                pl.BlockSpec((Bb * N, Cin), lambda g: (g, 0)),   # packed point rows
                full(w1b), full(b1), full(g1), full(be1),
                full(w2b), full(b2), full(g2), full(be2),
                full(w3b), full(b3),
            ],
            out_specs=pl.BlockSpec((Bb, 1, Cout), lambda g: (g, 0, 0)),
        ),
        compiler_params=pltpu.CompilerParams(
            dimension_semantics=("parallel",),
            vmem_limit_bytes=int(vmem_budget),
        ),
    )(x_rows, w1b, b1, g1, be1, w2b, b2, g2, be2, w3b, b3)
    return out.reshape(B, Cout)


def init_params(key, n_channel_in, n_channel_out=128):
    """Deterministic synthetic init matching PyTorch module shapes.
    Conv weights stored transposed as (C_in, C_out) for direct x @ W use.
    Biases / gamma / beta stored as (1, C) for lane-broadcast."""
    k1, k2, k3, k4, k5, k6 = jax.random.split(key, 6)

    def conv_init(kw, kb, cin, cout):
        bound = 1.0 / jnp.sqrt(cin)                       # PyTorch Conv1d default
        w = jax.random.uniform(kw, (cin, cout), jnp.float32, -bound, bound)
        b = jax.random.uniform(kb, (1, cout), jnp.float32, -bound, bound)
        return w, b

    w1t, b1 = conv_init(k1, k2, n_channel_in, 64)
    w2t, b2 = conv_init(k3, k4, 64, 128)
    w3t, b3 = conv_init(k5, k6, 128, n_channel_out)
    g1, be1 = jnp.ones((1, 64), jnp.float32), jnp.zeros((1, 64), jnp.float32)
    g2, be2 = jnp.ones((1, 128), jnp.float32), jnp.zeros((1, 128), jnp.float32)
    return (w1t, b1, g1, be1, w2t, b2, g2, be2, w3t, b3)


def pointnet_reference(x_ncw, params, matmul_dtype=jnp.float32):
    """Pure-JAX reference mirroring the PyTorch forward pass.
    matmul_dtype=bfloat16 mirrors the kernel's matmul numerics exactly."""
    (w1t, b1, g1, be1, w2t, b2, g2, be2, w3t, b3) = params
    x = jnp.transpose(x_ncw, (0, 2, 1))                   # (B, N, Cin)

    def mm(a, w):
        return jnp.einsum('bni,io->bno', a.astype(matmul_dtype),
                          w.astype(matmul_dtype),
                          preferred_element_type=jnp.float32)

    def gn(h, gamma, beta):
        mu = jnp.mean(h, axis=(1, 2), keepdims=True)
        var = jnp.mean((h - mu) ** 2, axis=(1, 2), keepdims=True)
        return (h - mu) * lax.rsqrt(var + EPS) * gamma + beta

    h = mm(x, w1t) + b1
    h = jax.nn.relu(gn(h, g1, be1))
    h = mm(h, w2t) + b2
    h = jax.nn.relu(gn(h, g2, be2))
    h = mm(h, w3t) + b3
    return jnp.max(h, axis=1)                             # (B, C_out)


if __name__ == "__main__":
    key = jax.random.PRNGKey(0)
    k_x, k_p = jax.random.split(key)

    B, C_IN, N_POINTS, C_OUT = 2, 6, 16, 128
    x = jax.random.normal(k_x, (B, C_IN, N_POINTS), jnp.float32)   # PyTorch NCW
    params = init_params(k_p, C_IN, C_OUT)

    out = jax.block_until_ready(pointnet_forward(x, params))
    assert out.shape == (B, C_OUT), out.shape

    # Tight check vs a reference using identical bf16 matmul numerics.
    ref_bf16 = jax.block_until_ready(pointnet_reference(x, params, jnp.bfloat16))
    assert jnp.allclose(out, ref_bf16, atol=1e-2, rtol=1e-2), "mismatch vs bf16 reference"

    # Loose check vs the full-f32 (PyTorch-semantics) reference.
    ref_f32 = jax.block_until_ready(pointnet_reference(x, params, jnp.float32))
    assert jnp.allclose(out, ref_f32, atol=1e-1, rtol=1e-1), "mismatch vs f32 reference"

    print("KERNEL_OK")
</pallas_src>

<mosaic_0001>
module attributes {stable_mosaic.version = 11 : i64} {
  func.func @pointnet_kernel(%arg0: i32, %arg1: memref<16x6xbf16, #tpu.memory_space<vmem>>, %arg2: memref<6x64xbf16, #tpu.memory_space<vmem>>, %arg3: memref<1x64xf32, #tpu.memory_space<vmem>>, %arg4: memref<1x64xf32, #tpu.memory_space<vmem>>, %arg5: memref<1x64xf32, #tpu.memory_space<vmem>>, %arg6: memref<64x128xbf16, #tpu.memory_space<vmem>>, %arg7: memref<1x128xf32, #tpu.memory_space<vmem>>, %arg8: memref<1x128xf32, #tpu.memory_space<vmem>>, %arg9: memref<1x128xf32, #tpu.memory_space<vmem>>, %arg10: memref<128x128xbf16, #tpu.memory_space<vmem>>, %arg11: memref<1x128xf32, #tpu.memory_space<vmem>>, %arg12: memref<1x1x128xf32, #tpu.memory_space<vmem>>) attributes {dimension_semantics = [#tpu.dimension_semantics<parallel>], iteration_bounds = array<i64: 2>, scalar_prefetch = 0 : i64, scratch_operands = 0 : i64, tpu.core_type = #tpu.core_type<tc>, window_params = [{transform_indices = @transform_0, window_bounds = array<i64: 16, 6>}, {pipeline_mode = #tpu.pipeline_mode<synchronous>, transform_indices = @transform_1, window_bounds = array<i64: 6, 64>}, {pipeline_mode = #tpu.pipeline_mode<synchronous>, transform_indices = @transform_2, window_bounds = array<i64: 1, 64>}, {pipeline_mode = #tpu.pipeline_mode<synchronous>, transform_indices = @transform_3, window_bounds = array<i64: 1, 64>}, {pipeline_mode = #tpu.pipeline_mode<synchronous>, transform_indices = @transform_4, window_bounds = array<i64: 1, 64>}, {pipeline_mode = #tpu.pipeline_mode<synchronous>, transform_indices = @transform_5, window_bounds = array<i64: 64, 128>}, {pipeline_mode = #tpu.pipeline_mode<synchronous>, transform_indices = @transform_6, window_bounds = array<i64: 1, 128>}, {pipeline_mode = #tpu.pipeline_mode<synchronous>, transform_indices = @transform_7, window_bounds = array<i64: 1, 128>}, {pipeline_mode = #tpu.pipeline_mode<synchronous>, transform_indices = @transform_8, window_bounds = array<i64: 1, 128>}, {pipeline_mode = #tpu.pipeline_mode<synchronous>, transform_indices = @transform_9, window_bounds = array<i64: 128, 128>}, {pipeline_mode = #tpu.pipeline_mode<synchronous>, transform_indices = @transform_10, window_bounds = array<i64: 1, 128>}, {transform_indices = @transform_11, window_bounds = array<i64: 1, 1, 128>}]} {
    %c0 = arith.constant 0 : index
    %c0_0 = arith.constant 0 : index
    %0 = vector.load %arg1[%c0, %c0_0] : memref<16x6xbf16, #tpu.memory_space<vmem>>, vector<16x6xbf16>
    %c0_1 = arith.constant 0 : index
    %c0_2 = arith.constant 0 : index
    %1 = vector.load %arg2[%c0_1, %c0_2] : memref<6x64xbf16, #tpu.memory_space<vmem>>, vector<6x64xbf16>
    %cst = arith.constant dense<0.000000e+00> : vector<16x64xf32>
    %2 = tpu.matmul %0, %1, %cst {dimension_numbers = #tpu.dot_dimension_numbers<[1], [0], [0], [1], [0, 0, 1, 1], [], []>} : vector<16x6xbf16>, vector<6x64xbf16>, vector<16x64xf32> -> vector<16x64xf32>
    %c0_3 = arith.constant 0 : index
    %c0_4 = arith.constant 0 : index
    %3 = vector.load %arg3[%c0_3, %c0_4] : memref<1x64xf32, #tpu.memory_space<vmem>>, vector<1x64xf32>
    %4 = vector.broadcast %3 : vector<1x64xf32> to vector<16x64xf32>
    %5 = arith.addf %2, %4 : vector<16x64xf32>
    %c0_5 = arith.constant 0 : index
    %c0_6 = arith.constant 0 : index
    %6 = vector.load %arg4[%c0_5, %c0_6] : memref<1x64xf32, #tpu.memory_space<vmem>>, vector<1x64xf32>
    %c0_7 = arith.constant 0 : index
    %c0_8 = arith.constant 0 : index
    %7 = vector.load %arg5[%c0_7, %c0_8] : memref<1x64xf32, #tpu.memory_space<vmem>>, vector<1x64xf32>
    %8 = vector.shape_cast %5 : vector<16x64xf32> to vector<1x16x64xf32>
    %cst_9 = arith.constant dense<0.000000e+00> : vector<1x64xf32>
    %9 = vector.multi_reduction <add>, %8, %cst_9 [1] : vector<1x16x64xf32> to vector<1x64xf32>
    %10 = vector.shape_cast %9 : vector<1x64xf32> to vector<1x1x64xf32>
    %11 = arith.mulf %8, %8 : vector<1x16x64xf32>
    %cst_10 = arith.constant dense<0.000000e+00> : vector<1x64xf32>
    %12 = vector.multi_reduction <add>, %11, %cst_10 [1] : vector<1x16x64xf32> to vector<1x64xf32>
    %13 = vector.shape_cast %12 : vector<1x64xf32> to vector<1x1x64xf32>
    %cst_11 = arith.constant dense<0.000000e+00> : vector<1x1xf32>
    %14 = vector.multi_reduction <add>, %10, %cst_11 [2] : vector<1x1x64xf32> to vector<1x1xf32>
    %15 = vector.shape_cast %14 : vector<1x1xf32> to vector<1x1x1xf32>
    %cst_12 = arith.constant dense<0.000000e+00> : vector<1x1xf32>
    %16 = vector.multi_reduction <add>, %13, %cst_12 [2] : vector<1x1x64xf32> to vector<1x1xf32>
    %17 = vector.shape_cast %16 : vector<1x1xf32> to vector<1x1x1xf32>
    %cst_13 = arith.constant 9.765625E-4 : f32
    %18 = vector.broadcast %cst_13 : f32 to vector<1x1x1xf32>
    %19 = arith.mulf %15, %18 : vector<1x1x1xf32>
    %cst_14 = arith.constant 9.765625E-4 : f32
    %20 = vector.broadcast %cst_14 : f32 to vector<1x1x1xf32>
    %21 = arith.mulf %17, %20 : vector<1x1x1xf32>
    %22 = arith.mulf %19, %19 : vector<1x1x1xf32>
    %23 = arith.subf %21, %22 : vector<1x1x1xf32>
    %cst_15 = arith.constant 9.99999974E-6 : f32
    %24 = vector.broadcast %cst_15 : f32 to vector<1x1x1xf32>
    %25 = arith.addf %23, %24 : vector<1x1x1xf32>
    %26 = math.rsqrt %25 : vector<1x1x1xf32>
    %27 = vector.shape_cast %6 : vector<1x64xf32> to vector<1x1x64xf32>
    %28 = vector.broadcast %26 : vector<1x1x1xf32> to vector<1x1x64xf32>
    %29 = arith.mulf %28, %27 : vector<1x1x64xf32>
    %30 = vector.broadcast %19 : vector<1x1x1xf32> to vector<1x1x64xf32>
    %31 = arith.mulf %30, %29 : vector<1x1x64xf32>
    %32 = vector.shape_cast %7 : vector<1x64xf32> to vector<1x1x64xf32>
    %33 = arith.subf %32, %31 : vector<1x1x64xf32>
    %34 = vector.broadcast %29 : vector<1x1x64xf32> to vector<1x16x64xf32>
    %35 = arith.mulf %8, %34 : vector<1x16x64xf32>
    %36 = vector.broadcast %33 : vector<1x1x64xf32> to vector<1x16x64xf32>
    %37 = arith.addf %35, %36 : vector<1x16x64xf32>
    %cst_16 = arith.constant 0.000000e+00 : f32
    %38 = vector.broadcast %cst_16 : f32 to vector<1x16x64xf32>
    %39 = arith.maximumf %37, %38 : vector<1x16x64xf32>
    %40 = arith.truncf %39 : vector<1x16x64xf32> to vector<1x16x64xbf16>
    %41 = vector.shape_cast %40 : vector<1x16x64xbf16> to vector<16x64xbf16>
    %c0_17 = arith.constant 0 : index
    %c0_18 = arith.constant 0 : index
    %42 = vector.load %arg6[%c0_17, %c0_18] : memref<64x128xbf16, #tpu.memory_space<vmem>>, vector<64x128xbf16>
    %cst_19 = arith.constant dense<0.000000e+00> : vector<16x128xf32>
    %43 = tpu.matmul %41, %42, %cst_19 {dimension_numbers = #tpu.dot_dimension_numbers<[1], [0], [0], [1], [0, 0, 1, 1], [], []>} : vector<16x64xbf16>, vector<64x128xbf16>, vector<16x128xf32> -> vector<16x128xf32>
    %c0_20 = arith.constant 0 : index
    %c0_21 = arith.constant 0 : index
    %44 = vector.load %arg7[%c0_20, %c0_21] : memref<1x128xf32, #tpu.memory_space<vmem>>, vector<1x128xf32>
    %45 = vector.broadcast %44 : vector<1x128xf32> to vector<16x128xf32>
    %46 = arith.addf %43, %45 : vector<16x128xf32>
    %c0_22 = arith.constant 0 : index
    %c0_23 = arith.constant 0 : index
    %47 = vector.load %arg8[%c0_22, %c0_23] : memref<1x128xf32, #tpu.memory_space<vmem>>, vector<1x128xf32>
    %c0_24 = arith.constant 0 : index
    %c0_25 = arith.constant 0 : index
    %48 = vector.load %arg9[%c0_24, %c0_25] : memref<1x128xf32, #tpu.memory_space<vmem>>, vector<1x128xf32>
    %49 = vector.shape_cast %46 : vector<16x128xf32> to vector<1x16x128xf32>
    %cst_26 = arith.constant dense<0.000000e+00> : vector<1x128xf32>
    %50 = vector.multi_reduction <add>, %49, %cst_26 [1] : vector<1x16x128xf32> to vector<1x128xf32>
    %51 = vector.shape_cast %50 : vector<1x128xf32> to vector<1x1x128xf32>
    %52 = arith.mulf %49, %49 : vector<1x16x128xf32>
    %cst_27 = arith.constant dense<0.000000e+00> : vector<1x128xf32>
    %53 = vector.multi_reduction <add>, %52, %cst_27 [1] : vector<1x16x128xf32> to vector<1x128xf32>
    %54 = vector.shape_cast %53 : vector<1x128xf32> to vector<1x1x128xf32>
    %cst_28 = arith.constant dense<0.000000e+00> : vector<1x1xf32>
    %55 = vector.multi_reduction <add>, %51, %cst_28 [2] : vector<1x1x128xf32> to vector<1x1xf32>
    %56 = vector.shape_cast %55 : vector<1x1xf32> to vector<1x1x1xf32>
    %cst_29 = arith.constant dense<0.000000e+00> : vector<1x1xf32>
    %57 = vector.multi_reduction <add>, %54, %cst_29 [2] : vector<1x1x128xf32> to vector<1x1xf32>
    %58 = vector.shape_cast %57 : vector<1x1xf32> to vector<1x1x1xf32>
    %cst_30 = arith.constant 4.8828125E-4 : f32
    %59 = vector.broadcast %cst_30 : f32 to vector<1x1x1xf32>
    %60 = arith.mulf %56, %59 : vector<1x1x1xf32>
    %cst_31 = arith.constant 4.8828125E-4 : f32
    %61 = vector.broadcast %cst_31 : f32 to vector<1x1x1xf32>
    %62 = arith.mulf %58, %61 : vector<1x1x1xf32>
    %63 = arith.mulf %60, %60 : vector<1x1x1xf32>
    %64 = arith.subf %62, %63 : vector<1x1x1xf32>
    %cst_32 = arith.constant 9.99999974E-6 : f32
    %65 = vector.broadcast %cst_32 : f32 to vector<1x1x1xf32>
    %66 = arith.addf %64, %65 : vector<1x1x1xf32>
    %67 = math.rsqrt %66 : vector<1x1x1xf32>
    %68 = vector.shape_cast %47 : vector<1x128xf32> to vector<1x1x128xf32>
    %69 = vector.broadcast %67 : vector<1x1x1xf32> to vector<1x1x128xf32>
    %70 = arith.mulf %69, %68 : vector<1x1x128xf32>
    %71 = vector.broadcast %60 : vector<1x1x1xf32> to vector<1x1x128xf32>
    %72 = arith.mulf %71, %70 : vector<1x1x128xf32>
    %73 = vector.shape_cast %48 : vector<1x128xf32> to vector<1x1x128xf32>
    %74 = arith.subf %73, %72 : vector<1x1x128xf32>
    %75 = vector.broadcast %70 : vector<1x1x128xf32> to vector<1x16x128xf32>
    %76 = arith.mulf %49, %75 : vector<1x16x128xf32>
    %77 = vector.broadcast %74 : vector<1x1x128xf32> to vector<1x16x128xf32>
    %78 = arith.addf %76, %77 : vector<1x16x128xf32>
    %cst_33 = arith.constant 0.000000e+00 : f32
    %79 = vector.broadcast %cst_33 : f32 to vector<1x16x128xf32>
    %80 = arith.maximumf %78, %79 : vector<1x16x128xf32>
    %81 = arith.truncf %80 : vector<1x16x128xf32> to vector<1x16x128xbf16>
    %82 = vector.shape_cast %81 : vector<1x16x128xbf16> to vector<16x128xbf16>
    %c0_34 = arith.constant 0 : index
    %c0_35 = arith.constant 0 : index
    %83 = vector.load %arg10[%c0_34, %c0_35] : memref<128x128xbf16, #tpu.memory_space<vmem>>, vector<128x128xbf16>
    %cst_36 = arith.constant dense<0.000000e+00> : vector<16x128xf32>
    %84 = tpu.matmul %82, %83, %cst_36 {dimension_numbers = #tpu.dot_dimension_numbers<[1], [0], [0], [1], [0, 0, 1, 1], [], []>} : vector<16x128xbf16>, vector<128x128xbf16>, vector<16x128xf32> -> vector<16x128xf32>
    %85 = vector.shape_cast %84 : vector<16x128xf32> to vector<1x16x128xf32>
    %cst_37 = arith.constant dense<0xFF800000> : vector<1x128xf32>
    %86 = vector.multi_reduction <maximumf>, %85, %cst_37 [1] : vector<1x16x128xf32> to vector<1x128xf32>
    %87 = vector.shape_cast %86 : vector<1x128xf32> to vector<1x1x128xf32>
    %c0_38 = arith.constant 0 : index
    %c0_39 = arith.constant 0 : index
    %88 = vector.load %arg11[%c0_38, %c0_39] : memref<1x128xf32, #tpu.memory_space<vmem>>, vector<1x128xf32>
    %89 = vector.shape_cast %88 : vector<1x128xf32> to vector<1x1x128xf32>
    %90 = arith.addf %87, %89 : vector<1x1x128xf32>
    %c0_40 = arith.constant 0 : index
    %c0_41 = arith.constant 0 : index
    %c0_42 = arith.constant 0 : index
    %91 = vector.load %arg12[%c0_40, %c0_41, %c0_42] : memref<1x1x128xf32, #tpu.memory_space<vmem>>, vector<1x1x128xf32>
    tpu.vector_store %arg12[%c0_40, %c0_41, %c0_42], %90 {strides = array<i32>} : memref<1x1x128xf32, #tpu.memory_space<vmem>>, vector<1x1x128xf32>,
    return
  }
  func.func @transform_0(%arg0: i32) -> (i32, i32) {
    %c0_i32 = arith.constant 0 : i32
    %c0_i32_0 = arith.constant 0 : i32
    return %arg0, %c0_i32 : i32, i32
  }
  func.func @transform_1(%arg0: i32) -> (i32, i32) {
    %c0_i32 = arith.constant 0 : i32
    %c0_i32_0 = arith.constant 0 : i32
    %c0_i32_1 = arith.constant 0 : i32
    return %c0_i32, %c0_i32_0 : i32, i32
  }
  func.func @transform_2(%arg0: i32) -> (i32, i32) {
    %c0_i32 = arith.constant 0 : i32
    %c0_i32_0 = arith.constant 0 : i32
    %c0_i32_1 = arith.constant 0 : i32
    return %c0_i32, %c0_i32_0 : i32, i32
  }
  func.func @transform_3(%arg0: i32) -> (i32, i32) {
    %c0_i32 = arith.constant 0 : i32
    %c0_i32_0 = arith.constant 0 : i32
    %c0_i32_1 = arith.constant 0 : i32
    return %c0_i32, %c0_i32_0 : i32, i32
  }
  func.func @transform_4(%arg0: i32) -> (i32, i32) {
    %c0_i32 = arith.constant 0 : i32
    %c0_i32_0 = arith.constant 0 : i32
    %c0_i32_1 = arith.constant 0 : i32
    return %c0_i32, %c0_i32_0 : i32, i32
  }
  func.func @transform_5(%arg0: i32) -> (i32, i32) {
    %c0_i32 = arith.constant 0 : i32
    %c0_i32_0 = arith.constant 0 : i32
    %c0_i32_1 = arith.constant 0 : i32
    return %c0_i32, %c0_i32_0 : i32, i32
  }
  func.func @transform_6(%arg0: i32) -> (i32, i32) {
    %c0_i32 = arith.constant 0 : i32
    %c0_i32_0 = arith.constant 0 : i32
    %c0_i32_1 = arith.constant 0 : i32
    return %c0_i32, %c0_i32_0 : i32, i32
  }
  func.func @transform_7(%arg0: i32) -> (i32, i32) {
    %c0_i32 = arith.constant 0 : i32
    %c0_i32_0 = arith.constant 0 : i32
    %c0_i32_1 = arith.constant 0 : i32
    return %c0_i32, %c0_i32_0 : i32, i32
  }
  func.func @transform_8(%arg0: i32) -> (i32, i32) {
    %c0_i32 = arith.constant 0 : i32
    %c0_i32_0 = arith.constant 0 : i32
    %c0_i32_1 = arith.constant 0 : i32
    return %c0_i32, %c0_i32_0 : i32, i32
  }
  func.func @transform_9(%arg0: i32) -> (i32, i32) {
    %c0_i32 = arith.constant 0 : i32
    %c0_i32_0 = arith.constant 0 : i32
    %c0_i32_1 = arith.constant 0 : i32
    return %c0_i32, %c0_i32_0 : i32, i32
  }
  func.func @transform_10(%arg0: i32) -> (i32, i32) {
    %c0_i32 = arith.constant 0 : i32
    %c0_i32_0 = arith.constant 0 : i32
    %c0_i32_1 = arith.constant 0 : i32
    return %c0_i32, %c0_i32_0 : i32, i32
  }
  func.func @transform_11(%arg0: i32) -> (i32, i32, i32) {
    %c0_i32 = arith.constant 0 : i32
    %c0_i32_0 = arith.constant 0 : i32
    %c0_i32_1 = arith.constant 0 : i32
    return %arg0, %c0_i32, %c0_i32_0 : i32, i32, i32
  }
}

</mosaic_0001>

<llo_original>
// kernel: tpu_custom_call.1
$region0: #{tpu_custom_call.1}
  #allocation0 [shape = 'u32[]', space=smem, size = 0x4, offset = 0x4, fixed_abs, tag = 'smem constant byte address 0x4 - core index']
  #allocation1 [shape = 'u32[144,128]{1,0:T(1,128)}', space=vmem, size = 0x12000, scoped, tag = 'internal scratch']
  %s0 = inlined_call_operand.vmem [shape: bf16[32,6], index: 0, kind: input, shape index: {}]
  %s1 = inlined_call_operand.vmem [shape: bf16[6,64], index: 1, kind: input, shape index: {}]
  %s2 = inlined_call_operand.vmem [shape: f32[1,64], index: 2, kind: input, shape index: {}]
  %s3 = inlined_call_operand.vmem [shape: f32[1,64], index: 3, kind: input, shape index: {}]
  %s4 = inlined_call_operand.hbm [shape: f32[1,64], index: 4, kind: input, shape index: {}]
  %s5 = inlined_call_operand.vmem [shape: bf16[64,128], index: 5, kind: input, shape index: {}]
  %s6 = inlined_call_operand.vmem [shape: f32[1,128], index: 6, kind: input, shape index: {}]
  %s7 = inlined_call_operand.vmem [shape: f32[1,128], index: 7, kind: input, shape index: {}]
  %s8 = inlined_call_operand.vmem [shape: f32[1,128], index: 8, kind: input, shape index: {}]
  %s9 = inlined_call_operand.hbm [shape: bf16[128,128], index: 9, kind: input, shape index: {}]
  %s10 = inlined_call_operand.vmem [shape: f32[1,128], index: 10, kind: input, shape index: {}]
  %s11 = inlined_call_operand.hbm [shape: f32[2,1,128], index: 11, kind: output, shape index: {}]
  %s12 = sld [smem:[#allocation0]]
  $region85: #{tpu_custom_call.1} parent=0
    _
  %s14 = ssub.s32 1, %s12
  %s15 = scalar_select 0, %s14, %s12
  $region1: #{tpu_custom_call.1} parent=0
    #allocation2 [shape = 'u8[512]{0}', space=vmem, size = 0x400, scoped, tag = 'input window, operand 4, single buffered']
    #allocation3 [shape = 's32[2]{0}', space=sflag, size = 0x8, scoped, tag = 'scoped memory for tpu_custom_call.1']
    #allocation4 [shape = 's32[2]{0}', space=sflag, size = 0x8, scoped, tag = 'scoped memory for tpu_custom_call.1']
    #allocation5 [shape = 'u8[32768]{0}', space=vmem, size = 0x8000, scoped, tag = 'input window, operand 9, single buffered']
    #allocation6 [shape = 's32[1]{0}', space=sflag, size = 0x4, scoped, tag = 'scoped memory for tpu_custom_call.1']
    #allocation7 [shape = 'u8[1024]{0}', space=vmem, size = 0x400, scoped, tag = 'output window, operand 0']
    %16 = vsyncpa [#allocation3], 0
    %17 = vsyncpa [#allocation6], 0
    %18 = vsyncpa [#allocation4], 0
    %s19 = scalar_lea.sflag [#allocation4], 1
    %20 = vsyncpa %s19, 0
    loop: start=0, step=1, limit=4
    $region2: #{tpu_custom_call.1} parent=1 // loop_pre_header
      _
    $region3: #{tpu_custom_call.1} parent=1 // loop_header
      %s22 = sphi 0, %s26
      %p23 = scmp.ge.s32.totalorder %s22, 4
      %s32 = sphi 0, %s34
      %s35 = sphi 0, %s32
      %s36 = sphi 0, %s35
      %s52 = sphi 0, %s36
      %s56 = sphi 0, %s56
      %s58 = sphi 0, %s56
      %s59 = sphi 0, %s58
      %s73 = sphi 0, %s59
      %s77 = sphi 0, %s77
      %s79 = sphi 0, %s77
      %s80 = sphi 0, %s79
      %s94 = sphi 0, %s80
      %s98 = sphi 0, %s98
      %s100 = sphi 0, %s98
      %s101 = sphi 0, %s100
      %s115 = sphi 0, %s101
      %s119 = sphi 0, %s119
      %s121 = sphi 0, %s119
      %s122 = sphi 0, %s121
      %s136 = sphi 0, %s122
      %s140 = sphi 0, %s140
      %s142 = sphi 0, %s140
      %s143 = sphi 0, %s142
      %s157 = sphi 0, %s143
      %s161 = sphi 0, %s161
      %s163 = sphi 0, %s161
      %s164 = sphi 0, %s163
      %s178 = sphi 0, %s164
      %s182 = sphi 0, %s182
      %s184 = sphi 0, %s182
      %s185 = sphi 0, %s184
      %s199 = sphi 0, %s185
      %s203 = sphi 0, %s203
      %s205 = sphi 0, %s203
      %s206 = sphi 0, %s205
      %s220 = sphi 0, %s206
      %s224 = sphi 0, %s224
      %s226 = sphi 0, %s224
      %s227 = sphi 0, %s226
      %s241 = sphi 0, %s227
      %s245 = sphi 0, %s245
      %s247 = sphi 0, %s245
      %s248 = sphi 0, %s247
      %s262 = sphi 0, %s248
      %s268 = sphi 0, %s270
      %s271 = sphi 0, %s268
      %s272 = sphi 0, %s271
      %s288 = sphi 0, %s272
    $region4: #{tpu_custom_call.1} parent=1 // loop_header_branch
      %25 = sbr.rel (%p23) target = $region8
    $region5: #{tpu_custom_call.1} parent=1 // loop_body
      %s27 = ssub.s32 %s22, 1
      %s28 = ssub.s32 %s22, 2
      %s29 = sadd.s32 %s22, 1
      %s30 = ssub.s32 %s22, %s29
      %p31 = scmp.eq.s32.totalorder %s30, 0
      %s33 = sadd.s32 %s32, 1
      %s34 = scalar_select %p31, %s32, %s33
      %p37 = pneg %p31
      %p38 = scmp.eq.s32.totalorder %s22, 1
      %p39 = por %p37, %p38
      %p40 = scmp.ne.s32.totalorder %s32, %s35
      %p41 = scmp.eq.s32.totalorder %s22, 0
      %p42 = por %p40, %p41
      %p43 = scmp.ne.s32.totalorder %s32, %s35
      %p44 = scmp.eq.s32.totalorder %s27, 1
      %p45 = por %p43, %p44
      %p46 = scmp.ne.s32.totalorder %s35, %s36
      %p47 = scmp.eq.s32.totalorder %s27, 0
      %p48 = por %p46, %p47
      %p49 = scmp.ne.s32.totalorder %s35, %s36
      %p50 = scmp.eq.s32.totalorder %s28, 1
      %p51 = por %p49, %p50
      %p53 = scmp.ne.s32.totalorder %s36, %s52
      %p54 = scmp.eq.s32.totalorder %s28, 0
      %p55 = por %p53, %p54
      %s57 = sadd.s32 %s56, 1
      %p60 = scmp.eq.s32.totalorder %s22, 1
      %p61 = scmp.ne.s32.totalorder %s56, %s58
      %p62 = scmp.eq.s32.totalorder %s22, 0
      %p63 = por %p61, %p62
      %p64 = scmp.ne.s32.totalorder %s56, %s58
      %p65 = scmp.eq.s32.totalorder %s27, 1
      %p66 = por %p64, %p65
      %p67 = scmp.ne.s32.totalorder %s58, %s59
      %p68 = scmp.eq.s32.totalorder %s27, 0
      %p69 = por %p67, %p68
      %p70 = scmp.ne.s32.totalorder %s58, %s59
      %p71 = scmp.eq.s32.totalorder %s28, 1
      %p72 = por %p70, %p71
      %p74 = scmp.ne.s32.totalorder %s59, %s73
      %p75 = scmp.eq.s32.totalorder %s28, 0
      %p76 = por %p74, %p75
      %s78 = sadd.s32 %s77, 1
      %p81 = scmp.eq.s32.totalorder %s22, 1
      %p82 = scmp.ne.s32.totalorder %s77, %s79
      %p83 = scmp.eq.s32.totalorder %s22, 0
      %p84 = por %p82, %p83
      %p85 = scmp.ne.s32.totalorder %s77, %s79
      %p86 = scmp.eq.s32.totalorder %s27, 1
      %p87 = por %p85, %p86
      %p88 = scmp.ne.s32.totalorder %s79, %s80
      %p89 = scmp.eq.s32.totalorder %s27, 0
      %p90 = por %p88, %p89
      %p91 = scmp.ne.s32.totalorder %s79, %s80
      %p92 = scmp.eq.s32.totalorder %s28, 1
      %p93 = por %p91, %p92
      %p95 = scmp.ne.s32.totalorder %s80, %s94
      %p96 = scmp.eq.s32.totalorder %s28, 0
      %p97 = por %p95, %p96
      %s99 = sadd.s32 %s98, 1
      %p102 = scmp.eq.s32.totalorder %s22, 1
      %p103 = scmp.ne.s32.totalorder %s98, %s100
      %p104 = scmp.eq.s32.totalorder %s22, 0
      %p105 = por %p103, %p104
      %p106 = scmp.ne.s32.totalorder %s98, %s100
      %p107 = scmp.eq.s32.totalorder %s27, 1
      %p108 = por %p106, %p107
      %p109 = scmp.ne.s32.totalorder %s100, %s101
      %p110 = scmp.eq.s32.totalorder %s27, 0
      %p111 = por %p109, %p110
      %p112 = scmp.ne.s32.totalorder %s100, %s101
      %p113 = scmp.eq.s32.totalorder %s28, 1
      %p114 = por %p112, %p113
      %p116 = scmp.ne.s32.totalorder %s101, %s115
      %p117 = scmp.eq.s32.totalorder %s28, 0
      %p118 = por %p116, %p117
      %s120 = sadd.s32 %s119, 1
      %p123 = scmp.eq.s32.totalorder %s22, 1
      %p124 = scmp.ne.s32.totalorder %s119, %s121
      %p125 = scmp.eq.s32.totalorder %s22, 0
      %p126 = por %p124, %p125
      %p127 = scmp.ne.s32.totalorder %s119, %s121
      %p128 = scmp.eq.s32.totalorder %s27, 1
      %p129 = por %p127, %p128
      %p130 = scmp.ne.s32.totalorder %s121, %s122
      %p131 = scmp.eq.s32.totalorder %s27, 0
      %p132 = por %p130, %p131
      %p133 = scmp.ne.s32.totalorder %s121, %s122
      %p134 = scmp.eq.s32.totalorder %s28, 1
      %p135 = por %p133, %p134
      %p137 = scmp.ne.s32.totalorder %s122, %s136
      %p138 = scmp.eq.s32.totalorder %s28, 0
      %p139 = por %p137, %p138
      %s141 = sadd.s32 %s140, 1
      %p144 = scmp.eq.s32.totalorder %s22, 1
      %p145 = scmp.ne.s32.totalorder %s140, %s142
      %p146 = scmp.eq.s32.totalorder %s22, 0
      %p147 = por %p145, %p146
      %p148 = scmp.ne.s32.totalorder %s140, %s142
      %p149 = scmp.eq.s32.totalorder %s27, 1
      %p150 = por %p148, %p149
      %p151 = scmp.ne.s32.totalorder %s142, %s143
      %p152 = scmp.eq.s32.totalorder %s27, 0
      %p153 = por %p151, %p152
      %p154 = scmp.ne.s32.totalorder %s142, %s143
      %p155 = scmp.eq.s32.totalorder %s28, 1
      %p156 = por %p154, %p155
      %p158 = scmp.ne.s32.totalorder %s143, %s157
      %p159 = scmp.eq.s32.totalorder %s28, 0
      %p160 = por %p158, %p159
      %s162 = sadd.s32 %s161, 1
      %p165 = scmp.eq.s32.totalorder %s22, 1
      %p166 = scmp.ne.s32.totalorder %s161, %s163
      %p167 = scmp.eq.s32.totalorder %s22, 0
      %p168 = por %p166, %p167
      %p169 = scmp.ne.s32.totalorder %s161, %s163
      %p170 = scmp.eq.s32.totalorder %s27, 1
      %p171 = por %p169, %p170
      %p172 = scmp.ne.s32.totalorder %s163, %s164
      %p173 = scmp.eq.s32.totalorder %s27, 0
      %p174 = por %p172, %p173
      %p175 = scmp.ne.s32.totalorder %s163, %s164
      %p176 = scmp.eq.s32.totalorder %s28, 1
      %p177 = por %p175, %p176
      %p179 = scmp.ne.s32.totalorder %s164, %s178
      %p180 = scmp.eq.s32.totalorder %s28, 0
      %p181 = por %p179, %p180
      %s183 = sadd.s32 %s182, 1
      %p186 = scmp.eq.s32.totalorder %s22, 1
      %p187 = scmp.ne.s32.totalorder %s182, %s184
      %p188 = scmp.eq.s32.totalorder %s22, 0
      %p189 = por %p187, %p188
      %p190 = scmp.ne.s32.totalorder %s182, %s184
      %p191 = scmp.eq.s32.totalorder %s27, 1
      %p192 = por %p190, %p191
      %p193 = scmp.ne.s32.totalorder %s184, %s185
      %p194 = scmp.eq.s32.totalorder %s27, 0
      %p195 = por %p193, %p194
      %p196 = scmp.ne.s32.totalorder %s184, %s185
      %p197 = scmp.eq.s32.totalorder %s28, 1
      %p198 = por %p196, %p197
      %p200 = scmp.ne.s32.totalorder %s185, %s199
      %p201 = scmp.eq.s32.totalorder %s28, 0
      %p202 = por %p200, %p201
      %s204 = sadd.s32 %s203, 1
      %p207 = scmp.eq.s32.totalorder %s22, 1
      %p208 = scmp.ne.s32.totalorder %s203, %s205
      %p209 = scmp.eq.s32.totalorder %s22, 0
      %p210 = por %p208, %p209
      %p211 = scmp.ne.s32.totalorder %s203, %s205
      %p212 = scmp.eq.s32.totalorder %s27, 1
      %p213 = por %p211, %p212
      %p214 = scmp.ne.s32.totalorder %s205, %s206
      %p215 = scmp.eq.s32.totalorder %s27, 0
      %p216 = por %p214, %p215
      %p217 = scmp.ne.s32.totalorder %s205, %s206
      %p218 = scmp.eq.s32.totalorder %s28, 1
      %p219 = por %p217, %p218
      %p221 = scmp.ne.s32.totalorder %s206, %s220
      %p222 = scmp.eq.s32.totalorder %s28, 0
      %p223 = por %p221, %p222
      %s225 = sadd.s32 %s224, 1
      %p228 = scmp.eq.s32.totalorder %s22, 1
      %p229 = scmp.ne.s32.totalorder %s224, %s226
      %p230 = scmp.eq.s32.totalorder %s22, 0
      %p231 = por %p229, %p230
      %p232 = scmp.ne.s32.totalorder %s224, %s226
      %p233 = scmp.eq.s32.totalorder %s27, 1
      %p234 = por %p232, %p233
      %p235 = scmp.ne.s32.totalorder %s226, %s227
      %p236 = scmp.eq.s32.totalorder %s27, 0
      %p237 = por %p235, %p236
      %p238 = scmp.ne.s32.totalorder %s226, %s227
      %p239 = scmp.eq.s32.totalorder %s28, 1
      %p240 = por %p238, %p239
      %p242 = scmp.ne.s32.totalorder %s227, %s241
      %p243 = scmp.eq.s32.totalorder %s28, 0
      %p244 = por %p242, %p243
      %s246 = sadd.s32 %s245, 1
      %p249 = scmp.eq.s32.totalorder %s22, 1
      %p250 = scmp.ne.s32.totalorder %s245, %s247
      %p251 = scmp.eq.s32.totalorder %s22, 0
      %p252 = por %p250, %p251
      %p253 = scmp.ne.s32.totalorder %s245, %s247
      %p254 = scmp.eq.s32.totalorder %s27, 1
      %p255 = por %p253, %p254
      %p256 = scmp.ne.s32.totalorder %s247, %s248
      %p257 = scmp.eq.s32.totalorder %s27, 0
      %p258 = por %p256, %p257
      %p259 = scmp.ne.s32.totalorder %s247, %s248
      %p260 = scmp.eq.s32.totalorder %s28, 1
      %p261 = por %p259, %p260
      %p263 = scmp.ne.s32.totalorder %s248, %s262
      %p264 = scmp.eq.s32.totalorder %s28, 0
      %p265 = por %p263, %p264
      %s266 = ssub.s32 %s22, %s29
      %p267 = scmp.eq.s32.totalorder %s266, 0
      %s269 = sadd.s32 %s268, 1
      %s270 = scalar_select %p267, %s268, %s269
      %p273 = pneg %p267
      %p274 = scmp.eq.s32.totalorder %s22, 1
      %p275 = por %p273, %p274
      %p276 = scmp.ne.s32.totalorder %s268, %s271
      %p277 = scmp.eq.s32.totalorder %s22, 0
      %p278 = por %p276, %p277
      %p279 = scmp.ne.s32.totalorder %s268, %s271
      %p280 = scmp.eq.s32.totalorder %s27, 1
      %p281 = por %p279, %p280
      %p282 = scmp.ne.s32.totalorder %s271, %s272
      %p283 = scmp.eq.s32.totalorder %s27, 0
      %p284 = por %p282, %p283
      %p285 = scmp.ne.s32.totalorder %s271, %s272
      %p286 = scmp.eq.s32.totalorder %s28, 1
      %p287 = por %p285, %p286
      %p289 = scmp.ne.s32.totalorder %s272, %s288
      %p290 = scmp.eq.s32.totalorder %s28, 0
      %p291 = por %p289, %p290
      %p292 = scmp.le.s32.totalorder 1, %s22
      %p293 = scmp.lt.s32.totalorder %s22, 3
      %p294 = pnand %p292, %p293
      %p295 = pneg %p294
      // Predicated region
      $region9: #{tpu_custom_call.1} parent=5 // pred_check
        _
      $region10: #{tpu_custom_call.1} parent=5 // pred_check_branch
        %297 = sbr.rel (%p294) target = $region12
      $region11: #{tpu_custom_call.1} parent=5 // pred_region
        %s298 = ssub.s32 %s22, 1
        // Predicated region
        $region13: #{tpu_custom_call.1} parent=11 // pred_check
          %p299 = pneg %p69
        $region14: #{tpu_custom_call.1} parent=11 // pred_check_branch
          %301 = sbr.rel (%p299) target = $region16
        $region15: #{tpu_custom_call.1} parent=11 // pred_region
          _
        $region16: #{tpu_custom_call.1} parent=11 // pred_fallthru
          _
        // Predicated region
        $region17: #{tpu_custom_call.1} parent=11 // pred_check
          %p302 = pneg %p90
        $region18: #{tpu_custom_call.1} parent=11 // pred_check_branch
          %304 = sbr.rel (%p302) target = $region20
        $region19: #{tpu_custom_call.1} parent=11 // pred_region
          _
        $region20: #{tpu_custom_call.1} parent=11 // pred_fallthru
          _
        // Predicated region
        $region21: #{tpu_custom_call.1} parent=11 // pred_check
          %p305 = pneg %p111
        $region22: #{tpu_custom_call.1} parent=11 // pred_check_branch
          %307 = sbr.rel (%p305) target = $region24
        $region23: #{tpu_custom_call.1} parent=11 // pred_region
          _
        $region24: #{tpu_custom_call.1} parent=11 // pred_fallthru
          _
        // Predicated region
        $region25: #{tpu_custom_call.1} parent=11 // pred_check
          %p308 = pneg %p132
        $region26: #{tpu_custom_call.1} parent=11 // pred_check_branch
          %310 = sbr.rel (%p308) target = $region28
        $region27: #{tpu_custom_call.1} parent=11 // pred_region
          %s312 = ssub.s32 16, 16
          %313 = vsyncadd [#allocation3], %s312
          %s315 = sshll.u32 [#allocation2], 4
          %s316 = int_to_ptr.vmem [resolvable:$true] %s315
          %318 = dma.hbm_to_vmem [thread:$0]  %s4, 16, %s316, [#allocation3]
        $region28: #{tpu_custom_call.1} parent=11 // pred_fallthru
          _
        // Predicated region
        $region29: #{tpu_custom_call.1} parent=11 // pred_check
          %p319 = pneg %p153
        $region30: #{tpu_custom_call.1} parent=11 // pred_check_branch
          %321 = sbr.rel (%p319) target = $region32
        $region31: #{tpu_custom_call.1} parent=11 // pred_region
          _
        $region32: #{tpu_custom_call.1} parent=11 // pred_fallthru
          _
        // Predicated region
        $region33: #{tpu_custom_call.1} parent=11 // pred_check
          %p322 = pneg %p174
        $region34: #{tpu_custom_call.1} parent=11 // pred_check_branch
          %324 = sbr.rel (%p322) target = $region36
        $region35: #{tpu_custom_call.1} parent=11 // pred_region
          _
        $region36: #{tpu_custom_call.1} parent=11 // pred_fallthru
          _
        // Predicated region
        $region37: #{tpu_custom_call.1} parent=11 // pred_check
          %p325 = pneg %p195
        $region38: #{tpu_custom_call.1} parent=11 // pred_check_branch
          %327 = sbr.rel (%p325) target = $region40
        $region39: #{tpu_custom_call.1} parent=11 // pred_region
          _
        $region40: #{tpu_custom_call.1} parent=11 // pred_fallthru
          _
        // Predicated region
        $region41: #{tpu_custom_call.1} parent=11 // pred_check
          %p328 = pneg %p216
        $region42: #{tpu_custom_call.1} parent=11 // pred_check_branch
          %330 = sbr.rel (%p328) target = $region44
        $region43: #{tpu_custom_call.1} parent=11 // pred_region
          _
        $region44: #{tpu_custom_call.1} parent=11 // pred_fallthru
          _
        // Predicated region
        $region45: #{tpu_custom_call.1} parent=11 // pred_check
          %p331 = pneg %p237
        $region46: #{tpu_custom_call.1} parent=11 // pred_check_branch
          %333 = sbr.rel (%p331) target = $region48
        $region47: #{tpu_custom_call.1} parent=11 // pred_region
          %s335 = ssub.s32 1024, 1024
          %336 = vsyncadd [#allocation6], %s335
          %s337 = sshll.u32 [#allocation5], 4
          %s338 = int_to_ptr.vmem [resolvable:$true] %s337
          %343 = dma.hbm_to_vmem [thread:$0]  %s9, 1024, %s338, [#allocation6], 64, 64, 4
        $region48: #{tpu_custom_call.1} parent=11 // pred_fallthru
          _
        // Predicated region
        $region49: #{tpu_custom_call.1} parent=11 // pred_check
          %p344 = pneg %p258
        $region50: #{tpu_custom_call.1} parent=11 // pred_check_branch
          %346 = sbr.rel (%p344) target = $region52
        $region51: #{tpu_custom_call.1} parent=11 // pred_region
          _
        $region52: #{tpu_custom_call.1} parent=11 // pred_fallthru
          _
      $region12: #{tpu_custom_call.1} parent=5 // pred_fallthru
        _
      %p347 = scmp.lt.s32.totalorder %s22, 2
      // Predicated region
      $region53: #{tpu_custom_call.1} parent=5 // pred_check
        %p348 = pneg %p347
      $region54: #{tpu_custom_call.1} parent=5 // pred_check_branch
        %350 = sbr.rel (%p348) target = $region56
      $region55: #{tpu_custom_call.1} parent=5 // pred_region
        // Predicated region
        $region57: #{tpu_custom_call.1} parent=55 // pred_check
          %p351 = pneg %p42
        $region58: #{tpu_custom_call.1} parent=55 // pred_check_branch
          %353 = sbr.rel (%p351) target = $region60
        $region59: #{tpu_custom_call.1} parent=55 // pred_region
          %s354 = smul.u32 2, %s22
          %p355 = scmp.lt.s32.totalorder %s354, 3
          %s356 = scalar_select %p355, %s354, 3
          %s357 = smul.addr %s356, 4
          %s358 = scalar_lea.vmem %s0, %s357
          %s359 = smul.u32 2, %s22
        $region60: #{tpu_custom_call.1} parent=55 // pred_fallthru
          _
      $region56: #{tpu_custom_call.1} parent=5 // pred_fallthru
        _
      %p360 = scmp.le.s32.totalorder 1, %s22
      %p361 = scmp.lt.s32.totalorder %s22, 3
      %p362 = pnand %p360, %p361
      %p363 = pneg %p362
      // Predicated region
      $region61: #{tpu_custom_call.1} parent=5 // pred_check
        _
      $region62: #{tpu_custom_call.1} parent=5 // pred_check_branch
        %365 = sbr.rel (%p362) target = $region64
      $region63: #{tpu_custom_call.1} parent=5 // pred_region
        %s366 = ssub.s32 %s22, 1
        // Predicated region
        $region65: #{tpu_custom_call.1} parent=63 // pred_check
          %p367 = pneg %p132
        $region66: #{tpu_custom_call.1} parent=63 // pred_check_branch
          %369 = sbr.rel (%p367) target = $region68
        $region67: #{tpu_custom_call.1} parent=63 // pred_region
          %370 = dma.done [#allocation3], 16
        $region68: #{tpu_custom_call.1} parent=63 // pred_fallthru
          _
        // Predicated region
        $region69: #{tpu_custom_call.1} parent=63 // pred_check
          %p371 = pneg %p237
        $region70: #{tpu_custom_call.1} parent=63 // pred_check_branch
          %373 = sbr.rel (%p371) target = $region72
        $region71: #{tpu_custom_call.1} parent=63 // pred_region
          %374 = dma.done [#allocation6], 1024
        $region72: #{tpu_custom_call.1} parent=63 // pred_fallthru
          _
        %s375 = smul.u32 2, %s27
        %p376 = scmp.lt.s32.totalorder %s375, 3
        %s377 = scalar_select %p376, %s375, 3
        %s378 = smul.addr %s377, 4
        %s379 = scalar_lea.vmem %s0, %s378
        %p380 = pneg %p48
        %p381 = pneg %p45
        %p382 = pneg %p69
        %p383 = pneg %p66
        %p384 = pneg %p90
        %p385 = pneg %p87
        %p386 = pneg %p111
        %p387 = pneg %p108
        %p388 = pneg %p132
        %p389 = pneg %p129
        %p390 = pneg %p153
        %p391 = pneg %p150
        %p392 = pneg %p174
        %p393 = pneg %p171
        %p394 = pneg %p195
        %p395 = pneg %p192
        %p396 = pneg %p216
        %p397 = pneg %p213
        %p398 = pneg %p237
        %p399 = pneg %p234
        %p400 = pneg %p258
        %p401 = pneg %p255
        %p402 = pneg %p284
        %p403 = pneg %p281
        %s404 = sand.u32 %s271, 1
        %s405 = scalar_lea.sflag [#allocation4], %s404
        %s406 = sand.u32 %s271, 1
        %s407 = scalar_lea.vmem [#allocation7], %s406
        %s408 = smul.u32 2, %s27
        %p409 = scmp.lt.s32.totalorder %s408, 3
        %s410 = scalar_select %p409, %s408, 3
        %s411 = smul.addr %s410, 4
        %s412 = scalar_lea.vmem %s0, %s411
        %s413 = smul.u32 2, %s27
        %v415 = vld [vmem:[%s412] sm:$0xf]
        %v416 = vld [vmem:[%s412 + $0x4] sm:$0xf]
        %v417 = vld [vmem:[%s1] sm:$0x7]
        %v418 = vld [vmem:[%s2] sm:$0x1]
        %v420 = vlaneseq
        %v421 = vshrl.u32 %v420, 7
        %v422 = vsub.s32 0, %v421
        %v423 = vrot.slane %v418, %v422
        %v427 = vunpack.c.l.b16 %v415
        %v428 = vunpack.c.l.b16 %v416
        %v429 = vpack.c.b16 %v428, %v427
        %vm430 = vcmask 48128
        %v432 = vsel %vm430, %v429, 0
        %vm434 = vcmask 1042432
        %v436 = vsel %vm434, %v417, 0
        %438 = vmatprep.subr.bf16.mxu0 0
        %439 = vmatpush1.bf16.msra.mxu0 %v436
        %440 = vmatprep.subr.bf16.mxu0 0
        %441 = vmatpush1.bf16.msra.mxu0 0
        %442 = vmatprep.subr.bf16.mxu0 0
        %443 = vmatpush1.bf16.msra.mxu0 0
        %444 = vmatprep.subr.bf16.mxu0 0
        %445 = vmatpush1.bf16.msra.mxu0 0
        %446 = vmatprep.subr.bf16.mxu0 0
        %447 = vmatpush1.bf16.msra.mxu0 0
        %448 = vmatprep.subr.bf16.mxu0 0
        %449 = vmatpush1.bf16.msra.mxu0 0
        %450 = vmatprep.subr.bf16.mxu0 0
        %451 = vmatpush1.bf16.msra.mxu0 0
        %452 = vmatprep.subr.bf16.mxu0 0
        %453 = vmatpush1.bf16.msra.mxu0 0
        %454 = vmatprep.subr.bf16.mxu0 0
        %455 = vmatpush1.bf16.msra.mxu0 0
        %456 = vmatprep.subr.bf16.mxu0 0
        %457 = vmatpush1.bf16.msra.mxu0 0
        %458 = vmatprep.subr.bf16.mxu0 0
        %459 = vmatpush1.bf16.msra.mxu0 0
        %460 = vmatprep.subr.bf16.mxu0 0
        %461 = vmatpush1.bf16.msra.mxu0 0
        %462 = vmatprep.subr.bf16.mxu0 0
        %463 = vmatpush1.bf16.msra.mxu0 0
        %464 = vmatprep.subr.bf16.mxu0 0
        %465 = vmatpush1.bf16.msra.mxu0 0
        %466 = vmatprep.subr.bf16.mxu0 0
        %467 = vmatpush1.bf16.msra.mxu0 0
        %468 = vmatprep.subr.bf16.mxu0 0
        %469 = vmatpush1.bf16.msra.mxu0 0
        %470 = vmatprep.mubr.bf16.mxu0 0
        %471 = vmatmul.mubr.bf16.gmra.mrb[0].mxu0 %v432
        %v472 = vpop.f32.mrb[0].mxu0
        %v473 = vadd.f32 %v423, %v472
        %v474 = vpop.f32.mrb[0].mxu0
        %v475 = vpop.f32.mrb[0].mxu0
        %v476 = vadd.f32 %v423, %v475
        %v477 = vpop.f32.mrb[0].mxu0
        %478 = vdwg.mxu0
        %v479 = vld [vmem:[%s3] sm:$0x1]
        %v480 = vld [vmem:[#allocation2] sm:$0x1]
        %vm481 = vcmask 523264
        %v482 = vsel %vm481, %v473, 0.0
        %v483 = vsel %vm481, %v476, 0.0
        %v484 = vadd.f32 %v482, %v483
        %v485 = vrot.slane %v484, 4
        %v486 = vadd.f32 %v484, %v485
        %v487 = vrot.slane %v486, 2
        %v488 = vadd.f32 %v486, %v487
        %v489 = vrot.slane %v488, 1
        %v490 = vadd.f32 %v488, %v489
        %v491 = vmul.f32 %v473, %v473
        %v492 = vmul.f32 %v476, %v476
        %v493 = vsel %vm481, %v491, 0.0
        %v494 = vsel %vm481, %v492, 0.0
        %v495 = vadd.f32 %v493, %v494
        %v496 = vrot.slane %v495, 4
        %v497 = vadd.f32 %v495, %v496
        %v498 = vrot.slane %v497, 2
        %v499 = vadd.f32 %v497, %v498
        %v500 = vrot.slane %v499, 1
        %v501 = vadd.f32 %v499, %v500
        %v502 = vsel %vm481, %v490, 0.0
        %503 = vadd.xlane.f32.xlu0 %v502
        %v504 = vpop.xlane.xlu0 %503
        %v505 = vsel %vm481, %v501, 0.0
        %506 = vadd.xlane.f32.xlu0 %v505
        %v507 = vpop.xlane.xlu0 %506
        %v508 = vmul.f32 %v504, 0.0009765625
        %v509 = vmul.f32 %v507, 0.0009765625
        %v510 = vmul.f32 %v508, %v508
        %v511 = vsub.f32 %v509, %v510
        %v512 = vadd.f32 %v511, 1e-05
        %v513 = vrsqrt.pop %v512
        %v514 = vmul.f32 %v513, %v479
        %v515 = vmul.f32 %v508, %v514
        %v516 = vsub.f32 %v480, %v515
        %v518 = vlaneseq
        %v519 = vshrl.u32 %v518, 7
        %v520 = vsub.s32 0, %v519
        %v521 = vrot.slane %v514, %v520
        %v523 = vmul.f32 %v473, %v521
        %v524 = vmul.f32 %v476, %v521
        %v526 = vlaneseq
        %v527 = vshrl.u32 %v526, 7
        %v528 = vsub.s32 0, %v527
        %v529 = vrot.slane %v516, %v528
        %v531 = vadd.f32 %v523, %v529
        %v532 = vadd.f32 %v524, %v529
        %v533 = vmax.f32 %v531, 0.0
        %v534 = vmax.f32 %v532, 0.0
        %v535 = vpack.c.bf16 %v534, %v533
        %v536 = vld [vmem:[%s5] sm:$0xf]
        %v537 = vld [vmem:[%s5 + $0x4] sm:$0xf]
        %v538 = vld [vmem:[%s5 + $0x8] sm:$0xf]
        %v539 = vld [vmem:[%s5 + $0xc] sm:$0xf]
        %v540 = vld [vmem:[%s5 + $0x10] sm:$0xf]
        %v541 = vld [vmem:[%s5 + $0x14] sm:$0xf]
        %v542 = vld [vmem:[%s5 + $0x18] sm:$0xf]
        %v543 = vld [vmem:[%s5 + $0x1c] sm:$0xf]
        %v544 = vld [vmem:[%s6] sm:$0x1]
        %v546 = vlaneseq
        %v547 = vshrl.u32 %v546, 7
        %v548 = vsub.s32 0, %v547
        %v549 = vrot.slane %v544, %v548
        %v559 = vunpack.c.l.b16 %v536
        %v560 = vunpack.c.l.b16 %v537
        %v561 = vunpack.c.l.b16 %v538
        %v562 = vunpack.c.l.b16 %v539
        %v563 = vunpack.c.l.b16 %v540
        %v564 = vunpack.c.l.b16 %v541
        %v565 = vunpack.c.l.b16 %v542
        %v566 = vunpack.c.l.b16 %v543
        %v567 = vpack.c.b16 %v560, %v559
        %v568 = vpack.c.b16 %v562, %v561
        %v569 = vpack.c.b16 %v564, %v563
        %v570 = vpack.c.b16 %v566, %v565
        %v576 = vsel %vm481, %v535, 0
        %578 = vmatprep.subr.bf16.mxu0 0
        %579 = vmatpush1.bf16.msra.mxu0 %v567
        %580 = vmatprep.subr.bf16.mxu0 0
        %581 = vmatpush1.bf16.msra.mxu0 %v568
        %582 = vmatprep.subr.bf16.mxu0 0
        %583 = vmatpush1.bf16.msra.mxu0 %v569
        %584 = vmatprep.subr.bf16.mxu0 0
        %585 = vmatpush1.bf16.msra.mxu0 %v570
        %586 = vmatprep.subr.bf16.mxu0 0
        %587 = vmatpush1.bf16.msra.mxu0 0
        %588 = vmatprep.subr.bf16.mxu0 0
        %589 = vmatpush1.bf16.msra.mxu0 0
        %590 = vmatprep.subr.bf16.mxu0 0
        %591 = vmatpush1.bf16.msra.mxu0 0
        %592 = vmatprep.subr.bf16.mxu0 0
        %593 = vmatpush1.bf16.msra.mxu0 0
        %594 = vmatprep.subr.bf16.mxu0 0
        %595 = vmatpush1.bf16.msra.mxu0 0
        %596 = vmatprep.subr.bf16.mxu0 0
        %597 = vmatpush1.bf16.msra.mxu0 0
        %598 = vmatprep.subr.bf16.mxu0 0
        %599 = vmatpush1.bf16.msra.mxu0 0
        %600 = vmatprep.subr.bf16.mxu0 0
        %601 = vmatpush1.bf16.msra.mxu0 0
        %602 = vmatprep.subr.bf16.mxu0 0
        %603 = vmatpush1.bf16.msra.mxu0 0
        %604 = vmatprep.subr.bf16.mxu0 0
        %605 = vmatpush1.bf16.msra.mxu0 0
        %606 = vmatprep.subr.bf16.mxu0 0
        %607 = vmatpush1.bf16.msra.mxu0 0
        %608 = vmatprep.subr.bf16.mxu0 0
        %609 = vmatpush1.bf16.msra.mxu0 0
        %610 = vmatprep.mubr.bf16.mxu0 0
        %611 = vmatmul.mubr.bf16.gmra.mrb[0].mxu0 %v576
        %v612 = vpop.f32.mrb[0].mxu0
        %v613 = vadd.f32 %v549, %v612
        %v614 = vpop.f32.mrb[0].mxu0
        %v615 = vpop.f32.mrb[0].mxu0
        %v616 = vadd.f32 %v549, %v615
        %v617 = vpop.f32.mrb[0].mxu0
        %618 = vdwg.mxu0
        %v619 = vld [vmem:[%s7] sm:$0x1]
        %v620 = vld [vmem:[%s8] sm:$0x1]
        %v621 = vadd.f32 %v613, %v616
        %v622 = vrot.slane %v621, 4
        %v623 = vadd.f32 %v621, %v622
        %v624 = vrot.slane %v623, 2
        %v625 = vadd.f32 %v623, %v624
        %v626 = vrot.slane %v625, 1
        %v627 = vadd.f32 %v625, %v626
        %v628 = vmul.f32 %v613, %v613
        %v629 = vmul.f32 %v616, %v616
        %v630 = vadd.f32 %v628, %v629
        %v631 = vrot.slane %v630, 4
        %v632 = vadd.f32 %v630, %v631
        %v633 = vrot.slane %v632, 2
        %v634 = vadd.f32 %v632, %v633
        %v635 = vrot.slane %v634, 1
        %v636 = vadd.f32 %v634, %v635
        %637 = vadd.xlane.f32.xlu0 %v627
        %v638 = vpop.xlane.xlu0 %637
        %639 = vadd.xlane.f32.xlu0 %v636
        %v640 = vpop.xlane.xlu0 %639
        %v641 = vmul.f32 %v638, 0.00048828125
        %v642 = vmul.f32 %v640, 0.00048828125
        %v643 = vmul.f32 %v641, %v641
        %v644 = vsub.f32 %v642, %v643
        %v645 = vadd.f32 %v644, 1e-05
        %v646 = vrsqrt.pop %v645
        %v647 = vmul.f32 %v646, %v619
        %v648 = vmul.f32 %v641, %v647
        %v649 = vsub.f32 %v620, %v648
        %v651 = vlaneseq
        %v652 = vshrl.u32 %v651, 7
        %v653 = vsub.s32 0, %v652
        %v654 = vrot.slane %v647, %v653
        %v656 = vmul.f32 %v613, %v654
        %v657 = vmul.f32 %v616, %v654
        %v659 = vlaneseq
        %v660 = vshrl.u32 %v659, 7
        %v661 = vsub.s32 0, %v660
        %v662 = vrot.slane %v649, %v661
        %v664 = vadd.f32 %v656, %v662
        %v665 = vadd.f32 %v657, %v662
        %v666 = vmax.f32 %v664, 0.0
        %v667 = vmax.f32 %v665, 0.0
        %v668 = vpack.c.bf16 %v667, %v666
        %v669 = vld [vmem:[#allocation5] sm:$0xf]
        %v670 = vld [vmem:[#allocation5 + $0x4] sm:$0xf]
        %v671 = vld [vmem:[#allocation5 + $0x8] sm:$0xf]
        %v672 = vld [vmem:[#allocation5 + $0xc] sm:$0xf]
        %v673 = vld [vmem:[#allocation5 + $0x10] sm:$0xf]
        %v674 = vld [vmem:[#allocation5 + $0x14] sm:$0xf]
        %v675 = vld [vmem:[#allocation5 + $0x18] sm:$0xf]
        %v676 = vld [vmem:[#allocation5 + $0x1c] sm:$0xf]
        %v677 = vld [vmem:[#allocation5 + $0x20] sm:$0xf]
        %v678 = vld [vmem:[#allocation5 + $0x24] sm:$0xf]
        %v679 = vld [vmem:[#allocation5 + $0x28] sm:$0xf]
        %v680 = vld [vmem:[#allocation5 + $0x2c] sm:$0xf]
        %v681 = vld [vmem:[#allocation5 + $0x30] sm:$0xf]
        %v682 = vld [vmem:[#allocation5 + $0x34] sm:$0xf]
        %v683 = vld [vmem:[#allocation5 + $0x38] sm:$0xf]
        %v684 = vld [vmem:[#allocation5 + $0x3c] sm:$0xf]
        %v701 = vunpack.c.l.b16 %v669
        %v702 = vunpack.c.l.b16 %v670
        %v703 = vunpack.c.l.b16 %v671
        %v704 = vunpack.c.l.b16 %v672
        %v705 = vunpack.c.l.b16 %v673
        %v706 = vunpack.c.l.b16 %v674
        %v707 = vunpack.c.l.b16 %v675
        %v708 = vunpack.c.l.b16 %v676
        %v709 = vunpack.c.l.b16 %v677
        %v710 = vunpack.c.l.b16 %v678
        %v711 = vunpack.c.l.b16 %v679
        %v712 = vunpack.c.l.b16 %v680
        %v713 = vunpack.c.l.b16 %v681
        %v714 = vunpack.c.l.b16 %v682
        %v715 = vunpack.c.l.b16 %v683
        %v716 = vunpack.c.l.b16 %v684
        %v717 = vpack.c.b16 %v702, %v701
        %v718 = vpack.c.b16 %v704, %v703
        %v719 = vpack.c.b16 %v706, %v705
        %v720 = vpack.c.b16 %v708, %v707
        %v721 = vpack.c.b16 %v710, %v709
        %v722 = vpack.c.b16 %v712, %v711
        %v723 = vpack.c.b16 %v714, %v713
        %v724 = vpack.c.b16 %v716, %v715
        %733 = vmatprep.subr.bf16.mxu0 0
        %734 = vmatpush1.bf16.msra.mxu0 %v717
        %735 = vmatprep.subr.bf16.mxu0 0
        %736 = vmatpush1.bf16.msra.mxu0 %v718
        %737 = vmatprep.subr.bf16.mxu0 0
        %738 = vmatpush1.bf16.msra.mxu0 %v719
        %739 = vmatprep.subr.bf16.mxu0 0
        %740 = vmatpush1.bf16.msra.mxu0 %v720
        %741 = vmatprep.subr.bf16.mxu0 0
        %742 = vmatpush1.bf16.msra.mxu0 %v721
        %743 = vmatprep.subr.bf16.mxu0 0
        %744 = vmatpush1.bf16.msra.mxu0 %v722
        %745 = vmatprep.subr.bf16.mxu0 0
        %746 = vmatpush1.bf16.msra.mxu0 %v723
        %747 = vmatprep.subr.bf16.mxu0 0
        %748 = vmatpush1.bf16.msra.mxu0 %v724
        %749 = vmatprep.subr.bf16.mxu0 0
        %750 = vmatpush1.bf16.msra.mxu0 0
        %751 = vmatprep.subr.bf16.mxu0 0
        %752 = vmatpush1.bf16.msra.mxu0 0
        %753 = vmatprep.subr.bf16.mxu0 0
        %754 = vmatpush1.bf16.msra.mxu0 0
        %755 = vmatprep.subr.bf16.mxu0 0
        %756 = vmatpush1.bf16.msra.mxu0 0
        %757 = vmatprep.subr.bf16.mxu0 0
        %758 = vmatpush1.bf16.msra.mxu0 0
        %759 = vmatprep.subr.bf16.mxu0 0
        %760 = vmatpush1.bf16.msra.mxu0 0
        %761 = vmatprep.subr.bf16.mxu0 0
        %762 = vmatpush1.bf16.msra.mxu0 0
        %763 = vmatprep.subr.bf16.mxu0 0
        %764 = vmatpush1.bf16.msra.mxu0 0
        %765 = vmatprep.mubr.bf16.mxu0 0
        %766 = vmatmul.mubr.bf16.gmra.mrb[0].mxu0 %v668
        %v767 = vpop.f32.mrb[0].mxu0
        %v768 = vadd.f32 0.0, %v767
        %v769 = vpop.f32.mrb[0].mxu0
        %v770 = vpop.f32.mrb[0].mxu0
        %v771 = vadd.f32 0.0, %v770
        %v772 = vpop.f32.mrb[0].mxu0
        %773 = vdwg.mxu0
        %v774 = vmax.f32 %v768, %v771
        %v775 = vrot.slane %v774, 4
        %v776 = vmax.f32 %v774, %v775
        %v777 = vrot.slane %v776, 2
        %v778 = vmax.f32 %v776, %v777
        %v779 = vrot.slane %v778, 1
        %v780 = vmax.f32 %v778, %v779
        %v781 = vld [vmem:[%s10] sm:$0x1]
        %v782 = vadd.f32 %v780, %v781
        %783 = vst [vmem:[%s407] sm:$0x1] %v782
        %s784 = sand.u32 %s271, 1
        %s785 = scalar_lea.sflag [#allocation4], %s784
        %s786 = sand.u32 %s271, 1
        %s787 = scalar_lea.vmem [#allocation7], %s786
        // Predicated region
        $region73: #{tpu_custom_call.1} parent=63 // pred_check
          %p788 = pneg %p281
        $region74: #{tpu_custom_call.1} parent=63 // pred_check_branch
          %790 = sbr.rel (%p788) target = $region76
        $region75: #{tpu_custom_call.1} parent=63 // pred_region
          %s792 = ssub.s32 16, 16
          %793 = vsyncadd %s785, %s792
          %s794 = smul.addr %s27, 16
          %s795 = scalar_lea.hbm %s11, %s794
          %s797 = sshll.u32 %s787, 4
          %s798 = int_to_ptr.vmem [resolvable:$true] %s797
          %800 = dma.vmem_to_hbm [thread:$0]  %s798, 16, %s795, %s785
        $region76: #{tpu_custom_call.1} parent=63 // pred_fallthru
          _
      $region64: #{tpu_custom_call.1} parent=5 // pred_fallthru
        _
      %p801 = scmp.le.s32.totalorder 2, %s22
      // Predicated region
      $region77: #{tpu_custom_call.1} parent=5 // pred_check
        %p802 = pneg %p801
      $region78: #{tpu_custom_call.1} parent=5 // pred_check_branch
        %804 = sbr.rel (%p802) target = $region80
      $region79: #{tpu_custom_call.1} parent=5 // pred_region
        %s805 = ssub.s32 %s22, 2
        // Predicated region
        $region81: #{tpu_custom_call.1} parent=79 // pred_check
          %p806 = pneg %p287
        $region82: #{tpu_custom_call.1} parent=79 // pred_check_branch
          %808 = sbr.rel (%p806) target = $region84
        $region83: #{tpu_custom_call.1} parent=79 // pred_region
          %s809 = sand.u32 %s272, 1
          %s810 = scalar_lea.sflag [#allocation4], %s809
          %s811 = sand.u32 %s272, 1
          %s812 = scalar_lea.vmem [#allocation7], %s811
          %813 = dma.done %s810, 16
        $region84: #{tpu_custom_call.1} parent=79 // pred_fallthru
          _
      $region80: #{tpu_custom_call.1} parent=5 // pred_fallthru
        _
    $region6: #{tpu_custom_call.1} parent=1 // loop_footer
      %s26 = sadd.s32 1, %s22
    $region7: #{tpu_custom_call.1} parent=1 // loop_footer_branch
      %21 = sbr.rel target = $region3
    $region8: #{tpu_custom_call.1} parent=1 // loop_exit
      _
    %814 = vsyncpa [#allocation3], 1
    %s815 = scalar_lea.sflag [#allocation3], 1
    %816 = vsyncpa %s815, 1
    %817 = vsyncpa [#allocation6], 1
    %818 = vsyncpa [#allocation4], 1
    %s819 = scalar_lea.sflag [#allocation4], 1
    %820 = vsyncpa %s819, 1

</llo_original>
